<compile_context>
chip_gen: v7x
topology: tpu7x:2x2x1
jax: 0.10.0
libtpu: 0.0.40
codegen_flags: <defaults>
</compile_context>

<pallas_src>
import math

import jax
import jax.numpy as jnp
from jax.experimental import pallas as pl
from jax.experimental.pallas import tpu as pltpu


def _chomp1d_kernel(x_ref, o_ref):
    # x_ref: (rows, L) whole input in VMEM; o_ref: (rows, L_out) whole output.
    # Static prefix slice along the lane axis -> one contiguous copy.
    o_ref[...] = x_ref[:, : o_ref.shape[-1]]


def chomp1d(x, chomp_size):
    """Pallas equivalent of torch Chomp1d: x[..., :-chomp_size]."""
    if not (0 < chomp_size < x.shape[-1]):
        raise ValueError("chomp_size must satisfy 0 < chomp_size < x.shape[-1]")
    *lead, L = x.shape
    L_out = L - chomp_size
    rows = math.prod(lead) if lead else 1

    # Flatten leading dims (batch, channels, ...) into one sublane axis.
    # x is contiguous, so this reshape is layout-only on the wrapper side.
    x2 = x.reshape(rows, L)

    out2 = pl.pallas_call(
        _chomp1d_kernel,
        out_shape=jax.ShapeDtypeStruct((rows, L_out), x.dtype),
        grid=(1,),
        # Blocks equal the full array extents, so the (8,128) divisibility
        # constraint is satisfied regardless of L / L_out.
        in_specs=[pl.BlockSpec((rows, L), lambda i: (0, 0))],
        out_specs=pl.BlockSpec((rows, L_out), lambda i: (0, 0)),
        compiler_params=pltpu.CompilerParams(
            dimension_semantics=("arbitrary",)),
    )(x2)
    return out2.reshape(*lead, L_out)


if __name__ == "__main__":
    key = jax.random.PRNGKey(0)

    # Small shapes consistent with Chomp1d's (batch, channels, length) usage.
    batch, channels, length = 2, 4, 16
    chomp_size = 3

    x = jax.random.normal(key, (batch, channels, length), jnp.float32)

    out = chomp1d(x, chomp_size)
    out = jax.block_until_ready(out)

    ref = x[:, :, :-chomp_size]
    assert out.shape == (batch, channels, length - chomp_size), out.shape
    assert out.dtype == x.dtype
    assert bool(jnp.array_equal(out, ref))
    assert bool(jnp.all(jnp.isfinite(out)))
    print("KERNEL_OK")
</pallas_src>

<mosaic_0001>
module attributes {stable_mosaic.version = 11 : i64} {
  func.func @_chomp1d_kernel(%arg0: i32, %arg1: memref<8x16xf32, #tpu.memory_space<vmem>>, %arg2: memref<8x13xf32, #tpu.memory_space<vmem>>) attributes {dimension_semantics = [#tpu.dimension_semantics<arbitrary>], iteration_bounds = array<i64: 1>, scalar_prefetch = 0 : i64, scratch_operands = 0 : i64, tpu.core_type = #tpu.core_type<tc>, window_params = [{pipeline_mode = #tpu.pipeline_mode<synchronous>, transform_indices = @transform_0, window_bounds = array<i64: 8, 16>}, {pipeline_mode = #tpu.pipeline_mode<synchronous>, transform_indices = @transform_1, window_bounds = array<i64: 8, 13>}]} {
    %c0 = arith.constant 0 : index
    %c0_0 = arith.constant 0 : index
    %0 = vector.load %arg1[%c0, %c0_0] : memref<8x16xf32, #tpu.memory_space<vmem>>, vector<8x13xf32>
    %c0_1 = arith.constant 0 : index
    %c0_2 = arith.constant 0 : index
    %1 = vector.load %arg2[%c0_1, %c0_2] : memref<8x13xf32, #tpu.memory_space<vmem>>, vector<8x13xf32>
    tpu.vector_store %arg2[%c0_1, %c0_2], %0 {strides = array<i32>} : memref<8x13xf32, #tpu.memory_space<vmem>>, vector<8x13xf32>,
    return
  }
  func.func @transform_0(%arg0: i32) -> (i32, i32) {
    %c0_i32 = arith.constant 0 : i32
    %c0_i32_0 = arith.constant 0 : i32
    %c0_i32_1 = arith.constant 0 : i32
    return %c0_i32, %c0_i32_0 : i32, i32
  }
  func.func @transform_1(%arg0: i32) -> (i32, i32) {
    %c0_i32 = arith.constant 0 : i32
    %c0_i32_0 = arith.constant 0 : i32
    %c0_i32_1 = arith.constant 0 : i32
    return %c0_i32, %c0_i32_0 : i32, i32
  }
}

</mosaic_0001>

<llo_original>
// kernel: tpu_custom_call.1
$region0: #{tpu_custom_call.1}
  #allocation0 [shape = 'u32[]', space=smem, size = 0x4, offset = 0x4, fixed_abs, tag = 'smem constant byte address 0x4 - core index']
  #allocation1 [shape = 'u32[144,128]{1,0:T(1,128)}', space=vmem, size = 0x12000, scoped, tag = 'internal scratch']
  %s0 = inlined_call_operand.hbm [shape: f32[8,16], index: 0, kind: input, shape index: {}]
  %s1 = inlined_call_operand.hbm [shape: f32[8,13], index: 1, kind: output, shape index: {}]
  %s2 = sld [smem:[#allocation0]]
  $region18: #{tpu_custom_call.1} parent=0
    _
  %s4 = ssub.s32 1, %s2
  %s5 = scalar_select 0, %s4, %s2
  $region1: #{tpu_custom_call.1} parent=0
    #allocation2 [shape = 'u8[4096]{0}', space=vmem, size = 0x1000, scoped, tag = 'input window, operand 0, single buffered']
    #allocation3 [shape = 's32[1]{0}', space=sflag, size = 0x4, scoped, tag = 'scoped memory for tpu_custom_call.1']
    #allocation4 [shape = 's32[1]{0}', space=sflag, size = 0x4, scoped, tag = 'scoped memory for tpu_custom_call.1']
    #allocation5 [shape = 'u8[4096]{0}', space=vmem, size = 0x1000, scoped, tag = 'output window, operand 0, single buffered']
    %6 = vsyncpa [#allocation3], 0
    %7 = vsyncpa [#allocation4], 0
    // Predicated region
    $region2: #{tpu_custom_call.1} parent=1 // pred_check
      _
    $region3: #{tpu_custom_call.1} parent=1 // pred_check_branch
      %9 = sbr.rel (0) target = $region5
    $region4: #{tpu_custom_call.1} parent=1 // pred_region
      %s11 = ssub.s32 128, 128
      %12 = vsyncadd [#allocation3], %s11
      %s14 = sshll.u32 [#allocation2], 4
      %s15 = int_to_ptr.vmem [resolvable:$true] %s14
      %17 = dma.hbm_to_vmem [thread:$0]  %s0, 128, %s15, [#allocation3]
    $region5: #{tpu_custom_call.1} parent=1 // pred_fallthru
      _
    // Predicated region
    $region6: #{tpu_custom_call.1} parent=1 // pred_check
      _
    $region7: #{tpu_custom_call.1} parent=1 // pred_check_branch
      %19 = sbr.rel (0) target = $region9
    $region8: #{tpu_custom_call.1} parent=1 // pred_region
      %20 = dma.done [#allocation3], 128
    $region9: #{tpu_custom_call.1} parent=1 // pred_fallthru
      _
    %v21 = vld [vmem:[#allocation2] sm:$0xff]
    %vm22 = vcmask 105472
    %23 = vst.msk [vmem:[#allocation5] sm:$0xff] %vm22, %v21
    // Predicated region
    $region10: #{tpu_custom_call.1} parent=1 // pred_check
      _
    $region11: #{tpu_custom_call.1} parent=1 // pred_check_branch
      %25 = sbr.rel (0) target = $region13
    $region12: #{tpu_custom_call.1} parent=1 // pred_region
      %s27 = ssub.s32 128, 128
      %28 = vsyncadd [#allocation4], %s27
      %s30 = sshll.u32 [#allocation5], 4
      %s31 = int_to_ptr.vmem [resolvable:$true] %s30
      %33 = dma.vmem_to_hbm [thread:$0]  %s31, 128, %s1, [#allocation4]
    $region13: #{tpu_custom_call.1} parent=1 // pred_fallthru
      _
    // Predicated region
    $region14: #{tpu_custom_call.1} parent=1 // pred_check
      _
    $region15: #{tpu_custom_call.1} parent=1 // pred_check_branch
      %35 = sbr.rel (0) target = $region17
    $region16: #{tpu_custom_call.1} parent=1 // pred_region
      %36 = dma.done [#allocation4], 128
    $region17: #{tpu_custom_call.1} parent=1 // pred_fallthru
      _
    %37 = vsyncpa [#allocation3], 1
    %38 = vsyncpa [#allocation4], 1

</llo_original>
